<compile_context>
chip_gen: v7x
topology: tpu7x:2x2x1
jax: 0.10.0
libtpu: 0.0.40
codegen_flags: <defaults>
</compile_context>

<pallas_src>
import functools

import jax
import jax.numpy as jnp
from jax import lax
from jax.experimental import pallas as pl
from jax.experimental.pallas import tpu as pltpu


def _sdpa_kernel(q_ref, k_ref, v_ref, o_ref, *, scale, num_heads, head_dim):
    """One block = (Bblk, S, H*D) lane-dense slab; all heads handled here."""
    outs = []
    for h in range(num_heads):                       # static unroll over heads
        hd = pl.ds(h * head_dim, head_dim)           # static per-head lane slice
        q_h = q_ref[:, :, hd] * scale                # (Bblk, Sq, D), pre-scaled Q
        k_h = k_ref[:, :, hd]                        # (Bblk, Sk, D)
        v_h = v_ref[:, :, hd]                        # (Bblk, Sk, D)

        # scores = (q * scale) @ k^T, K consumed un-transposed (batched over Bblk)
        s = lax.dot_general(
            q_h, k_h,
            dimension_numbers=(((2,), (2,)), ((0,), (0,))),
            preferred_element_type=jnp.float32,
        )                                            # (Bblk, Sq, Sk), f32

        # numerically stable softmax along the key axis
        s = s - jnp.max(s, axis=-1, keepdims=True)
        p = jnp.exp(s)
        p = p * pl.reciprocal(jnp.sum(p, axis=-1, keepdims=True), approx=False)

        # TODO(synk): dropout(p=0.2) omitted — the module runs with training=False.

        o_h = lax.dot_general(
            p, v_h,
            dimension_numbers=(((2,), (1,)), ((0,), (0,))),
            preferred_element_type=jnp.float32,
        )                                            # (Bblk, Sq, D), f32
        outs.append(o_h)

    # Single lane-dense store: (Bblk, Sq, H*D) — lane width H*D instead of D.
    o_ref[...] = jnp.concatenate(outs, axis=-1).astype(o_ref.dtype)


def _tensorcores_per_chip():
    # 2 TensorCores per chip on v7x (and v4/v5p megacore); v5e/v6e have one.
    try:
        kind = str(jax.devices()[0].device_kind).lower()
    except Exception:
        return 1
    return 2 if any(t in kind for t in ("v7", "v4", "v5p")) else 1


def sdpa_pallas(q, k, v, inv_scale_factor):
    """q,k,v: [B,H,S,D] float32 -> [B,H,Sq,D]."""
    B, H, Sq, D = q.shape
    Sk = k.shape[2]
    HD = H * D

    # Layout plumbing (outside the kernel, free): [B,H,S,D] -> [B,S,H*D] so the
    # heads sit on the lane axis and the kernel's loads/stores are denser.
    def to_lane_dense(x, S):
        return jnp.transpose(x, (0, 2, 1, 3)).reshape(B, S, HD)

    qq = to_lane_dense(q, Sq)
    kk = to_lane_dense(k, Sk)
    vv = to_lane_dense(v, Sk)

    # inv_scale_factor is known at trace time — fold into the kernel as a constant.
    # TODO(synk): if it ever arrives as a traced runtime tensor, pass it via
    # scalar-prefetch / SMEM instead of baking it in.
    scale = 1.0 / float(inv_scale_factor)
    kernel = functools.partial(_sdpa_kernel, scale=scale, num_heads=H, head_dim=D)

    # Grid selection: split batch over cores only where there are 2 TCs (v7x);
    # on single-TC v5e/v6e the batch loop is pure per-step overhead, so run
    # the whole (tiny) problem in one invocation.
    if _tensorcores_per_chip() >= 2 and B >= 2:
        grid = (B,)
        blk = lambda S: pl.BlockSpec((1, S, HD), lambda b: (b, 0, 0))
        dims = ("parallel",)
    else:
        grid = (1,)
        blk = lambda S: pl.BlockSpec((B, S, HD), lambda i: (0, 0, 0))
        dims = ("arbitrary",)

    out = pl.pallas_call(
        kernel,
        out_shape=jax.ShapeDtypeStruct((B, Sq, HD), q.dtype),
        grid=grid,
        in_specs=[blk(Sq), blk(Sk), blk(Sk)],
        out_specs=blk(Sq),
        compiler_params=pltpu.CompilerParams(dimension_semantics=dims),
    )(qq, kk, vv)

    # back to logical [B, H, Sq, D]
    return jnp.transpose(out.reshape(B, Sq, H, D), (0, 2, 1, 3))


def sdpa_reference(q, k, v, inv_scale_factor):
    s = jnp.einsum("bhqd,bhkd->bhqk", q, k,
                   precision=lax.Precision.HIGHEST) / inv_scale_factor
    p = jax.nn.softmax(s, axis=-1)
    return jnp.einsum("bhqk,bhkd->bhqd", p, v, precision=lax.Precision.HIGHEST)


if __name__ == "__main__":
    key = jax.random.PRNGKey(0)
    kq, kk_, kv = jax.random.split(key, 3)

    B, H, Sq, Sk, D = 2, 3, 8, 8, 16
    q = jax.random.normal(kq, (B, H, Sq, D), dtype=jnp.float32)
    k = jax.random.normal(kk_, (B, H, Sk, D), dtype=jnp.float32)
    v = jax.random.normal(kv, (B, H, Sk, D), dtype=jnp.float32)
    inv_scale_factor = float(D) ** 0.5

    out = sdpa_pallas(q, k, v, inv_scale_factor)
    out = jax.block_until_ready(out)

    ref = sdpa_reference(q, k, v, inv_scale_factor)
    # kernel is f32 end-to-end; headroom only for MXU f32-pass rounding
    assert jnp.allclose(out, ref, atol=2e-2, rtol=2e-2), "mismatch vs reference"

    print("KERNEL_OK")
</pallas_src>

<mosaic_0001>
module attributes {stable_mosaic.version = 11 : i64} {
  func.func @_sdpa_kernel(%arg0: i32, %arg1: memref<2x8x48xf32, #tpu.memory_space<vmem>>, %arg2: memref<2x8x48xf32, #tpu.memory_space<vmem>>, %arg3: memref<2x8x48xf32, #tpu.memory_space<vmem>>, %arg4: memref<2x8x48xf32, #tpu.memory_space<vmem>>) attributes {dimension_semantics = [#tpu.dimension_semantics<arbitrary>], iteration_bounds = array<i64: 1>, scalar_prefetch = 0 : i64, scratch_operands = 0 : i64, tpu.core_type = #tpu.core_type<tc>, window_params = [{pipeline_mode = #tpu.pipeline_mode<synchronous>, transform_indices = @transform_0, window_bounds = array<i64: 2, 8, 48>}, {pipeline_mode = #tpu.pipeline_mode<synchronous>, transform_indices = @transform_1, window_bounds = array<i64: 2, 8, 48>}, {pipeline_mode = #tpu.pipeline_mode<synchronous>, transform_indices = @transform_2, window_bounds = array<i64: 2, 8, 48>}, {pipeline_mode = #tpu.pipeline_mode<synchronous>, transform_indices = @transform_3, window_bounds = array<i64: 2, 8, 48>}]} {
    %c0 = arith.constant 0 : index
    %c0_0 = arith.constant 0 : index
    %c0_1 = arith.constant 0 : index
    %0 = vector.load %arg1[%c0, %c0_0, %c0_1] : memref<2x8x48xf32, #tpu.memory_space<vmem>>, vector<2x8x16xf32>
    %cst = arith.constant 2.500000e-01 : f32
    %1 = vector.broadcast %cst : f32 to vector<2x8x16xf32>
    %2 = arith.mulf %0, %1 : vector<2x8x16xf32>
    %c0_2 = arith.constant 0 : index
    %c0_3 = arith.constant 0 : index
    %c0_4 = arith.constant 0 : index
    %3 = vector.load %arg2[%c0_2, %c0_3, %c0_4] : memref<2x8x48xf32, #tpu.memory_space<vmem>>, vector<2x8x16xf32>
    %c0_5 = arith.constant 0 : index
    %c0_6 = arith.constant 0 : index
    %c0_7 = arith.constant 0 : index
    %4 = vector.load %arg3[%c0_5, %c0_6, %c0_7] : memref<2x8x48xf32, #tpu.memory_space<vmem>>, vector<2x8x16xf32>
    %cst_8 = arith.constant dense<0.000000e+00> : vector<2x8x8xf32>
    %5 = tpu.matmul %2, %3, %cst_8 {dimension_numbers = #tpu.dot_dimension_numbers<[2], [2], [1], [1], [0, 0, 0, 1, 1, 1], [0], [0]>} : vector<2x8x16xf32>, vector<2x8x16xf32>, vector<2x8x8xf32> -> vector<2x8x8xf32>
    %cst_9 = arith.constant dense<0xFF800000> : vector<2x8xf32>
    %6 = vector.multi_reduction <maximumf>, %5, %cst_9 [2] : vector<2x8x8xf32> to vector<2x8xf32>
    %7 = vector.shape_cast %6 : vector<2x8xf32> to vector<2x8x1xf32>
    %8 = vector.broadcast %7 : vector<2x8x1xf32> to vector<2x8x8xf32>
    %9 = arith.subf %5, %8 : vector<2x8x8xf32>
    %10 = math.exp %9 : vector<2x8x8xf32>
    %cst_10 = arith.constant dense<0.000000e+00> : vector<2x8xf32>
    %11 = vector.multi_reduction <add>, %10, %cst_10 [2] : vector<2x8x8xf32> to vector<2x8xf32>
    %12 = vector.shape_cast %11 : vector<2x8xf32> to vector<2x8x1xf32>
    %13 = tpu.reciprocal %12 : vector<2x8x1xf32> -> vector<2x8x1xf32>
    %14 = vector.broadcast %13 : vector<2x8x1xf32> to vector<2x8x8xf32>
    %15 = arith.mulf %10, %14 : vector<2x8x8xf32>
    %cst_11 = arith.constant dense<0.000000e+00> : vector<2x8x16xf32>
    %16 = tpu.matmul %15, %4, %cst_11 {dimension_numbers = #tpu.dot_dimension_numbers<[2], [1], [1], [2], [0, 0, 0, 1, 1, 2], [0], [0]>} : vector<2x8x8xf32>, vector<2x8x16xf32>, vector<2x8x16xf32> -> vector<2x8x16xf32>
    %c0_12 = arith.constant 0 : index
    %c0_13 = arith.constant 0 : index
    %c16 = arith.constant 16 : index
    %17 = vector.load %arg1[%c0_12, %c0_13, %c16] : memref<2x8x48xf32, #tpu.memory_space<vmem>>, vector<2x8x16xf32>
    %cst_14 = arith.constant 2.500000e-01 : f32
    %18 = vector.broadcast %cst_14 : f32 to vector<2x8x16xf32>
    %19 = arith.mulf %17, %18 : vector<2x8x16xf32>
    %c0_15 = arith.constant 0 : index
    %c0_16 = arith.constant 0 : index
    %c16_17 = arith.constant 16 : index
    %20 = vector.load %arg2[%c0_15, %c0_16, %c16_17] : memref<2x8x48xf32, #tpu.memory_space<vmem>>, vector<2x8x16xf32>
    %c0_18 = arith.constant 0 : index
    %c0_19 = arith.constant 0 : index
    %c16_20 = arith.constant 16 : index
    %21 = vector.load %arg3[%c0_18, %c0_19, %c16_20] : memref<2x8x48xf32, #tpu.memory_space<vmem>>, vector<2x8x16xf32>
    %cst_21 = arith.constant dense<0.000000e+00> : vector<2x8x8xf32>
    %22 = tpu.matmul %19, %20, %cst_21 {dimension_numbers = #tpu.dot_dimension_numbers<[2], [2], [1], [1], [0, 0, 0, 1, 1, 1], [0], [0]>} : vector<2x8x16xf32>, vector<2x8x16xf32>, vector<2x8x8xf32> -> vector<2x8x8xf32>
    %cst_22 = arith.constant dense<0xFF800000> : vector<2x8xf32>
    %23 = vector.multi_reduction <maximumf>, %22, %cst_22 [2] : vector<2x8x8xf32> to vector<2x8xf32>
    %24 = vector.shape_cast %23 : vector<2x8xf32> to vector<2x8x1xf32>
    %25 = vector.broadcast %24 : vector<2x8x1xf32> to vector<2x8x8xf32>
    %26 = arith.subf %22, %25 : vector<2x8x8xf32>
    %27 = math.exp %26 : vector<2x8x8xf32>
    %cst_23 = arith.constant dense<0.000000e+00> : vector<2x8xf32>
    %28 = vector.multi_reduction <add>, %27, %cst_23 [2] : vector<2x8x8xf32> to vector<2x8xf32>
    %29 = vector.shape_cast %28 : vector<2x8xf32> to vector<2x8x1xf32>
    %30 = tpu.reciprocal %29 : vector<2x8x1xf32> -> vector<2x8x1xf32>
    %31 = vector.broadcast %30 : vector<2x8x1xf32> to vector<2x8x8xf32>
    %32 = arith.mulf %27, %31 : vector<2x8x8xf32>
    %cst_24 = arith.constant dense<0.000000e+00> : vector<2x8x16xf32>
    %33 = tpu.matmul %32, %21, %cst_24 {dimension_numbers = #tpu.dot_dimension_numbers<[2], [1], [1], [2], [0, 0, 0, 1, 1, 2], [0], [0]>} : vector<2x8x8xf32>, vector<2x8x16xf32>, vector<2x8x16xf32> -> vector<2x8x16xf32>
    %c0_25 = arith.constant 0 : index
    %c0_26 = arith.constant 0 : index
    %c32 = arith.constant 32 : index
    %34 = vector.load %arg1[%c0_25, %c0_26, %c32] : memref<2x8x48xf32, #tpu.memory_space<vmem>>, vector<2x8x16xf32>
    %cst_27 = arith.constant 2.500000e-01 : f32
    %35 = vector.broadcast %cst_27 : f32 to vector<2x8x16xf32>
    %36 = arith.mulf %34, %35 : vector<2x8x16xf32>
    %c0_28 = arith.constant 0 : index
    %c0_29 = arith.constant 0 : index
    %c32_30 = arith.constant 32 : index
    %37 = vector.load %arg2[%c0_28, %c0_29, %c32_30] : memref<2x8x48xf32, #tpu.memory_space<vmem>>, vector<2x8x16xf32>
    %c0_31 = arith.constant 0 : index
    %c0_32 = arith.constant 0 : index
    %c32_33 = arith.constant 32 : index
    %38 = vector.load %arg3[%c0_31, %c0_32, %c32_33] : memref<2x8x48xf32, #tpu.memory_space<vmem>>, vector<2x8x16xf32>
    %cst_34 = arith.constant dense<0.000000e+00> : vector<2x8x8xf32>
    %39 = tpu.matmul %36, %37, %cst_34 {dimension_numbers = #tpu.dot_dimension_numbers<[2], [2], [1], [1], [0, 0, 0, 1, 1, 1], [0], [0]>} : vector<2x8x16xf32>, vector<2x8x16xf32>, vector<2x8x8xf32> -> vector<2x8x8xf32>
    %cst_35 = arith.constant dense<0xFF800000> : vector<2x8xf32>
    %40 = vector.multi_reduction <maximumf>, %39, %cst_35 [2] : vector<2x8x8xf32> to vector<2x8xf32>
    %41 = vector.shape_cast %40 : vector<2x8xf32> to vector<2x8x1xf32>
    %42 = vector.broadcast %41 : vector<2x8x1xf32> to vector<2x8x8xf32>
    %43 = arith.subf %39, %42 : vector<2x8x8xf32>
    %44 = math.exp %43 : vector<2x8x8xf32>
    %cst_36 = arith.constant dense<0.000000e+00> : vector<2x8xf32>
    %45 = vector.multi_reduction <add>, %44, %cst_36 [2] : vector<2x8x8xf32> to vector<2x8xf32>
    %46 = vector.shape_cast %45 : vector<2x8xf32> to vector<2x8x1xf32>
    %47 = tpu.reciprocal %46 : vector<2x8x1xf32> -> vector<2x8x1xf32>
    %48 = vector.broadcast %47 : vector<2x8x1xf32> to vector<2x8x8xf32>
    %49 = arith.mulf %44, %48 : vector<2x8x8xf32>
    %cst_37 = arith.constant dense<0.000000e+00> : vector<2x8x16xf32>
    %50 = tpu.matmul %49, %38, %cst_37 {dimension_numbers = #tpu.dot_dimension_numbers<[2], [1], [1], [2], [0, 0, 0, 1, 1, 2], [0], [0]>} : vector<2x8x8xf32>, vector<2x8x16xf32>, vector<2x8x16xf32> -> vector<2x8x16xf32>
    %51 = tpu.concatenate %16, %33, %50 in 2 : vector<2x8x16xf32>, vector<2x8x16xf32>, vector<2x8x16xf32> -> vector<2x8x48xf32>
    %c0_38 = arith.constant 0 : index
    %c0_39 = arith.constant 0 : index
    %c0_40 = arith.constant 0 : index
    %52 = vector.load %arg4[%c0_38, %c0_39, %c0_40] : memref<2x8x48xf32, #tpu.memory_space<vmem>>, vector<2x8x48xf32>
    tpu.vector_store %arg4[%c0_38, %c0_39, %c0_40], %51 {strides = array<i32>} : memref<2x8x48xf32, #tpu.memory_space<vmem>>, vector<2x8x48xf32>,
    return
  }
  func.func @transform_0(%arg0: i32) -> (i32, i32, i32) {
    %c0_i32 = arith.constant 0 : i32
    %c0_i32_0 = arith.constant 0 : i32
    %c0_i32_1 = arith.constant 0 : i32
    %c0_i32_2 = arith.constant 0 : i32
    return %c0_i32, %c0_i32_0, %c0_i32_1 : i32, i32, i32
  }
  func.func @transform_1(%arg0: i32) -> (i32, i32, i32) {
    %c0_i32 = arith.constant 0 : i32
    %c0_i32_0 = arith.constant 0 : i32
    %c0_i32_1 = arith.constant 0 : i32
    %c0_i32_2 = arith.constant 0 : i32
    return %c0_i32, %c0_i32_0, %c0_i32_1 : i32, i32, i32
  }
  func.func @transform_2(%arg0: i32) -> (i32, i32, i32) {
    %c0_i32 = arith.constant 0 : i32
    %c0_i32_0 = arith.constant 0 : i32
    %c0_i32_1 = arith.constant 0 : i32
    %c0_i32_2 = arith.constant 0 : i32
    return %c0_i32, %c0_i32_0, %c0_i32_1 : i32, i32, i32
  }
  func.func @transform_3(%arg0: i32) -> (i32, i32, i32) {
    %c0_i32 = arith.constant 0 : i32
    %c0_i32_0 = arith.constant 0 : i32
    %c0_i32_1 = arith.constant 0 : i32
    %c0_i32_2 = arith.constant 0 : i32
    return %c0_i32, %c0_i32_0, %c0_i32_1 : i32, i32, i32
  }
}

</mosaic_0001>

<llo_original>
// kernel: tpu_custom_call.1
$region0: #{tpu_custom_call.1}
  #allocation0 [shape = 'u32[]', space=smem, size = 0x4, offset = 0x4, fixed_abs, tag = 'smem constant byte address 0x4 - core index']
  #allocation1 [shape = 'u32[144,128]{1,0:T(1,128)}', space=vmem, size = 0x12000, scoped, tag = 'internal scratch']
  %s0 = inlined_call_operand.hbm [shape: f32[2,8,48], index: 0, kind: input, shape index: {}]
  %s1 = inlined_call_operand.hbm [shape: f32[2,8,48], index: 1, kind: input, shape index: {}]
  %s2 = inlined_call_operand.hbm [shape: f32[2,8,48], index: 2, kind: input, shape index: {}]
  %s3 = inlined_call_operand.hbm [shape: f32[2,8,48], index: 3, kind: output, shape index: {}]
  %s4 = sld [smem:[#allocation0]]
  $region34: #{tpu_custom_call.1} parent=0
    _
  %s6 = ssub.s32 1, %s4
  %s7 = scalar_select 0, %s6, %s4
  $region1: #{tpu_custom_call.1} parent=0
    #allocation2 [shape = 'u8[8192]{0}', space=vmem, size = 0x2000, scoped, tag = 'input window, operand 0, single buffered']
    #allocation3 [shape = 's32[1]{0}', space=sflag, size = 0x4, scoped, tag = 'scoped memory for tpu_custom_call.1']
    #allocation4 [shape = 's32[1]{0}', space=sflag, size = 0x4, scoped, tag = 'scoped memory for tpu_custom_call.1']
    #allocation5 [shape = 'u8[8192]{0}', space=vmem, size = 0x2000, scoped, tag = 'input window, operand 1, single buffered']
    #allocation6 [shape = 's32[1]{0}', space=sflag, size = 0x4, scoped, tag = 'scoped memory for tpu_custom_call.1']
    #allocation7 [shape = 'u8[8192]{0}', space=vmem, size = 0x2000, scoped, tag = 'input window, operand 2, single buffered']
    #allocation8 [shape = 'u8[8192]{0}', space=vmem, size = 0x2000, scoped, tag = 'output window, operand 0, single buffered']
    %8 = vsyncpa [#allocation3], 0
    %9 = vsyncpa [#allocation6], 0
    %10 = vsyncpa [#allocation4], 0
    // Predicated region
    $region2: #{tpu_custom_call.1} parent=1 // pred_check
      _
    $region3: #{tpu_custom_call.1} parent=1 // pred_check_branch
      %12 = sbr.rel (0) target = $region5
    $region4: #{tpu_custom_call.1} parent=1 // pred_region
      %s14 = ssub.s32 256, 256
      %15 = vsyncadd [#allocation3], %s14
      %s16 = sshll.u32 [#allocation2], 4
      %s17 = int_to_ptr.vmem [resolvable:$true] %s16
      %22 = dma.hbm_to_vmem [thread:$0]  %s0, 256, %s17, [#allocation3], 128, 128, 8
    $region5: #{tpu_custom_call.1} parent=1 // pred_fallthru
      _
    // Predicated region
    $region6: #{tpu_custom_call.1} parent=1 // pred_check
      _
    $region7: #{tpu_custom_call.1} parent=1 // pred_check_branch
      %24 = sbr.rel (0) target = $region9
    $region8: #{tpu_custom_call.1} parent=1 // pred_region
      %s26 = ssub.s32 256, 256
      %27 = vsyncadd [#allocation6], %s26
      %s28 = sshll.u32 [#allocation5], 4
      %s29 = int_to_ptr.vmem [resolvable:$true] %s28
      %34 = dma.hbm_to_vmem [thread:$0]  %s1, 256, %s29, [#allocation6], 128, 128, 8
    $region9: #{tpu_custom_call.1} parent=1 // pred_fallthru
      _
    // Predicated region
    $region10: #{tpu_custom_call.1} parent=1 // pred_check
      _
    $region11: #{tpu_custom_call.1} parent=1 // pred_check_branch
      %36 = sbr.rel (0) target = $region13
    $region12: #{tpu_custom_call.1} parent=1 // pred_region
      %s38 = ssub.s32 256, 256
      %39 = vsyncadd [#allocation6], %s38
      %s40 = sshll.u32 [#allocation7], 4
      %s41 = int_to_ptr.vmem [resolvable:$true] %s40
      %46 = dma.hbm_to_vmem [thread:$0]  %s2, 256, %s41, [#allocation6], 128, 128, 8
    $region13: #{tpu_custom_call.1} parent=1 // pred_fallthru
      _
    // Predicated region
    $region14: #{tpu_custom_call.1} parent=1 // pred_check
      _
    $region15: #{tpu_custom_call.1} parent=1 // pred_check_branch
      %48 = sbr.rel (0) target = $region17
    $region16: #{tpu_custom_call.1} parent=1 // pred_region
      %49 = dma.done [#allocation3], 256
    $region17: #{tpu_custom_call.1} parent=1 // pred_fallthru
      _
    // Predicated region
    $region18: #{tpu_custom_call.1} parent=1 // pred_check
      _
    $region19: #{tpu_custom_call.1} parent=1 // pred_check_branch
      %51 = sbr.rel (0) target = $region21
    $region20: #{tpu_custom_call.1} parent=1 // pred_region
      %52 = dma.done [#allocation6], 256
    $region21: #{tpu_custom_call.1} parent=1 // pred_fallthru
      _
    // Predicated region
    $region22: #{tpu_custom_call.1} parent=1 // pred_check
      _
    $region23: #{tpu_custom_call.1} parent=1 // pred_check_branch
      %54 = sbr.rel (0) target = $region25
    $region24: #{tpu_custom_call.1} parent=1 // pred_region
      %55 = dma.done [#allocation6], 256
    $region25: #{tpu_custom_call.1} parent=1 // pred_fallthru
      _
    %v56 = vld [vmem:[#allocation2] sm:$0xff]
    %v57 = vld [vmem:[#allocation2 + $0x8] sm:$0xff]
    %v58 = vmul.f32 %v56, 0.25
    %v59 = vmul.f32 %v57, 0.25
    %v60 = vld [vmem:[#allocation5] sm:$0xff]
    %v61 = vld [vmem:[#allocation5 + $0x8] sm:$0xff]
    %v62 = vld [vmem:[#allocation7] sm:$0xff]
    %v63 = vld [vmem:[#allocation7 + $0x8] sm:$0xff]
    %vm64 = vcmask 130048
    %v66 = vsel %vm64, %v58, 0
    %v69 = vsel %vm64, %v60, 0
    %71 = vmatprep.subr.mxu0 0.0
    %72 = vmatpush1.xpose.msra.mxu0 %v69
    %73 = vmatprep.subr.mxu0 0.0
    %74 = vmatpush1.xpose.msra.mxu0 0.0
    %75 = vmatprep.subr.mxu0 0.0
    %76 = vmatpush1.xpose.msra.mxu0 0.0
    %77 = vmatprep.subr.mxu0 0.0
    %78 = vmatpush1.xpose.msra.mxu0 0.0
    %79 = vmatprep.subr.mxu0 0.0
    %80 = vmatpush1.xpose.msra.mxu0 0.0
    %81 = vmatprep.subr.mxu0 0.0
    %82 = vmatpush1.xpose.msra.mxu0 0.0
    %83 = vmatprep.subr.mxu0 0.0
    %84 = vmatpush1.xpose.msra.mxu0 0.0
    %85 = vmatprep.subr.mxu0 0.0
    %86 = vmatpush1.xpose.msra.mxu0 0.0
    %87 = vmatprep.subr.mxu0 0.0
    %88 = vmatpush1.xpose.msra.mxu0 0.0
    %89 = vmatprep.subr.mxu0 0.0
    %90 = vmatpush1.xpose.msra.mxu0 0.0
    %91 = vmatprep.subr.mxu0 0.0
    %92 = vmatpush1.xpose.msra.mxu0 0.0
    %93 = vmatprep.subr.mxu0 0.0
    %94 = vmatpush1.xpose.msra.mxu0 0.0
    %95 = vmatprep.subr.mxu0 0.0
    %96 = vmatpush1.xpose.msra.mxu0 0.0
    %97 = vmatprep.subr.mxu0 0.0
    %98 = vmatpush1.xpose.msra.mxu0 0.0
    %99 = vmatprep.subr.mxu0 0.0
    %100 = vmatpush1.xpose.msra.mxu0 0.0
    %101 = vmatprep.subr.mxu0 0.0
    %102 = vmatpush1.xpose.msra.mxu0 0.0
    %103 = vmatprep.subr.mxu0 0.0
    %104 = vmatpush1.xpose.msra.mxu0 0.0
    %105 = vmatprep.subr.mxu0 0.0
    %106 = vmatpush1.xpose.msra.mxu0 0.0
    %107 = vmatprep.subr.mxu0 0.0
    %108 = vmatpush1.xpose.msra.mxu0 0.0
    %109 = vmatprep.subr.mxu0 0.0
    %110 = vmatpush1.xpose.msra.mxu0 0.0
    %111 = vmatprep.subr.mxu0 0.0
    %112 = vmatpush1.xpose.msra.mxu0 0.0
    %113 = vmatprep.subr.mxu0 0.0
    %114 = vmatpush1.xpose.msra.mxu0 0.0
    %115 = vmatprep.subr.mxu0 0.0
    %116 = vmatpush1.xpose.msra.mxu0 0.0
    %117 = vmatprep.subr.mxu0 0.0
    %118 = vmatpush1.xpose.msra.mxu0 0.0
    %119 = vmatprep.subr.mxu0 0.0
    %120 = vmatpush1.xpose.msra.mxu0 0.0
    %121 = vmatprep.subr.mxu0 0.0
    %122 = vmatpush1.xpose.msra.mxu0 0.0
    %123 = vmatprep.subr.mxu0 0.0
    %124 = vmatpush1.xpose.msra.mxu0 0.0
    %125 = vmatprep.subr.mxu0 0.0
    %126 = vmatpush1.xpose.msra.mxu0 0.0
    %127 = vmatprep.subr.mxu0 0.0
    %128 = vmatpush1.xpose.msra.mxu0 0.0
    %129 = vmatprep.subr.mxu0 0.0
    %130 = vmatpush1.xpose.msra.mxu0 0.0
    %131 = vmatprep.subr.mxu0 0.0
    %132 = vmatpush1.xpose.msra.mxu0 0.0
    %133 = vmatprep.subr.mxu0 0.0
    %134 = vmatpush1.xpose.msra.mxu0 0.0
    %135 = vmatprep.mubr.f32.mxu0 0.0
    %136 = vmatmul.mubr.f32.gmra.mrb[0].mxu0 %v66
    %v137 = vpop.f32.mrb[0].mxu0
    %v138 = vadd.f32 0.0, %v137
    %v139 = vpop.f32.mrb[0].mxu0
    %140 = vdwg.mxu0
    %v142 = vsel %vm64, %v59, 0
    %v145 = vsel %vm64, %v61, 0
    %147 = vmatprep.subr.mxu0 0.0
    %148 = vmatpush1.xpose.msra.mxu0 %v145
    %149 = vmatprep.subr.mxu0 0.0
    %150 = vmatpush1.xpose.msra.mxu0 0.0
    %151 = vmatprep.subr.mxu0 0.0
    %152 = vmatpush1.xpose.msra.mxu0 0.0
    %153 = vmatprep.subr.mxu0 0.0
    %154 = vmatpush1.xpose.msra.mxu0 0.0
    %155 = vmatprep.subr.mxu0 0.0
    %156 = vmatpush1.xpose.msra.mxu0 0.0
    %157 = vmatprep.subr.mxu0 0.0
    %158 = vmatpush1.xpose.msra.mxu0 0.0
    %159 = vmatprep.subr.mxu0 0.0
    %160 = vmatpush1.xpose.msra.mxu0 0.0
    %161 = vmatprep.subr.mxu0 0.0
    %162 = vmatpush1.xpose.msra.mxu0 0.0
    %163 = vmatprep.subr.mxu0 0.0
    %164 = vmatpush1.xpose.msra.mxu0 0.0
    %165 = vmatprep.subr.mxu0 0.0
    %166 = vmatpush1.xpose.msra.mxu0 0.0
    %167 = vmatprep.subr.mxu0 0.0
    %168 = vmatpush1.xpose.msra.mxu0 0.0
    %169 = vmatprep.subr.mxu0 0.0
    %170 = vmatpush1.xpose.msra.mxu0 0.0
    %171 = vmatprep.subr.mxu0 0.0
    %172 = vmatpush1.xpose.msra.mxu0 0.0
    %173 = vmatprep.subr.mxu0 0.0
    %174 = vmatpush1.xpose.msra.mxu0 0.0
    %175 = vmatprep.subr.mxu0 0.0
    %176 = vmatpush1.xpose.msra.mxu0 0.0
    %177 = vmatprep.subr.mxu0 0.0
    %178 = vmatpush1.xpose.msra.mxu0 0.0
    %179 = vmatprep.subr.mxu0 0.0
    %180 = vmatpush1.xpose.msra.mxu0 0.0
    %181 = vmatprep.subr.mxu0 0.0
    %182 = vmatpush1.xpose.msra.mxu0 0.0
    %183 = vmatprep.subr.mxu0 0.0
    %184 = vmatpush1.xpose.msra.mxu0 0.0
    %185 = vmatprep.subr.mxu0 0.0
    %186 = vmatpush1.xpose.msra.mxu0 0.0
    %187 = vmatprep.subr.mxu0 0.0
    %188 = vmatpush1.xpose.msra.mxu0 0.0
    %189 = vmatprep.subr.mxu0 0.0
    %190 = vmatpush1.xpose.msra.mxu0 0.0
    %191 = vmatprep.subr.mxu0 0.0
    %192 = vmatpush1.xpose.msra.mxu0 0.0
    %193 = vmatprep.subr.mxu0 0.0
    %194 = vmatpush1.xpose.msra.mxu0 0.0
    %195 = vmatprep.subr.mxu0 0.0
    %196 = vmatpush1.xpose.msra.mxu0 0.0
    %197 = vmatprep.subr.mxu0 0.0
    %198 = vmatpush1.xpose.msra.mxu0 0.0
    %199 = vmatprep.subr.mxu0 0.0
    %200 = vmatpush1.xpose.msra.mxu0 0.0
    %201 = vmatprep.subr.mxu0 0.0
    %202 = vmatpush1.xpose.msra.mxu0 0.0
    %203 = vmatprep.subr.mxu0 0.0
    %204 = vmatpush1.xpose.msra.mxu0 0.0
    %205 = vmatprep.subr.mxu0 0.0
    %206 = vmatpush1.xpose.msra.mxu0 0.0
    %207 = vmatprep.subr.mxu0 0.0
    %208 = vmatpush1.xpose.msra.mxu0 0.0
    %209 = vmatprep.subr.mxu0 0.0
    %210 = vmatpush1.xpose.msra.mxu0 0.0
    %211 = vmatprep.mubr.f32.mxu0 0.0
    %212 = vmatmul.mubr.f32.gmra.mrb[0].mxu0 %v142
    %v213 = vpop.f32.mrb[0].mxu0
    %v214 = vadd.f32 0.0, %v213
    %v215 = vpop.f32.mrb[0].mxu0
    %216 = vdwg.mxu0
    %vm217 = vcmask 64512
    %v218 = vsel %vm217, %v138, -inf
    %219 = vmax.xlane.f32.xlu0 %v218
    %v220 = vpop.xlane.xlu0 %219
    %v221 = vsel %vm217, %v214, -inf
    %222 = vmax.xlane.f32.xlu0 %v221
    %v223 = vpop.xlane.xlu0 %222
    %v224 = vsub.f32 %v138, %v220
    %v225 = vsub.f32 %v214, %v223
    %v226 = vmul.f32 %v224, 1.442695
    %v227 = vpow.pop %v226
    %v228 = vmul.f32 %v225, 1.442695
    %v229 = vpow.pop %v228
    %v230 = vsel %vm217, %v227, 0.0
    %231 = vadd.xlane.f32.xlu0 %v230
    %v232 = vpop.xlane.xlu0 %231
    %v233 = vsel %vm217, %v229, 0.0
    %234 = vadd.xlane.f32.xlu0 %v233
    %v235 = vpop.xlane.xlu0 %234
    %v236 = vrcp.pop %v232
    %v237 = vrcp.pop %v235
    %v238 = vmul.f32 %v227, %v236
    %v239 = vmul.f32 %v229, %v237
    %v241 = vsel %vm217, %v238, 0
    %243 = vmatprep.subr.mxu0 0.0
    %244 = vmatpush1.msra.mxu0 %v62
    %245 = vmatprep.subr.mxu0 0.0
    %246 = vmatpush1.msra.mxu0 0.0
    %247 = vmatprep.subr.mxu0 0.0
    %248 = vmatpush1.msra.mxu0 0.0
    %249 = vmatprep.subr.mxu0 0.0
    %250 = vmatpush1.msra.mxu0 0.0
    %251 = vmatprep.subr.mxu0 0.0
    %252 = vmatpush1.msra.mxu0 0.0
    %253 = vmatprep.subr.mxu0 0.0
    %254 = vmatpush1.msra.mxu0 0.0
    %255 = vmatprep.subr.mxu0 0.0
    %256 = vmatpush1.msra.mxu0 0.0
    %257 = vmatprep.subr.mxu0 0.0
    %258 = vmatpush1.msra.mxu0 0.0
    %259 = vmatprep.subr.mxu0 0.0
    %260 = vmatpush1.msra.mxu0 0.0
    %261 = vmatprep.subr.mxu0 0.0
    %262 = vmatpush1.msra.mxu0 0.0
    %263 = vmatprep.subr.mxu0 0.0
    %264 = vmatpush1.msra.mxu0 0.0
    %265 = vmatprep.subr.mxu0 0.0
    %266 = vmatpush1.msra.mxu0 0.0
    %267 = vmatprep.subr.mxu0 0.0
    %268 = vmatpush1.msra.mxu0 0.0
    %269 = vmatprep.subr.mxu0 0.0
    %270 = vmatpush1.msra.mxu0 0.0
    %271 = vmatprep.subr.mxu0 0.0
    %272 = vmatpush1.msra.mxu0 0.0
    %273 = vmatprep.subr.mxu0 0.0
    %274 = vmatpush1.msra.mxu0 0.0
    %275 = vmatprep.subr.mxu0 0.0
    %276 = vmatpush1.msra.mxu0 0.0
    %277 = vmatprep.subr.mxu0 0.0
    %278 = vmatpush1.msra.mxu0 0.0
    %279 = vmatprep.subr.mxu0 0.0
    %280 = vmatpush1.msra.mxu0 0.0
    %281 = vmatprep.subr.mxu0 0.0
    %282 = vmatpush1.msra.mxu0 0.0
    %283 = vmatprep.subr.mxu0 0.0
    %284 = vmatpush1.msra.mxu0 0.0
    %285 = vmatprep.subr.mxu0 0.0
    %286 = vmatpush1.msra.mxu0 0.0
    %287 = vmatprep.subr.mxu0 0.0
    %288 = vmatpush1.msra.mxu0 0.0
    %289 = vmatprep.subr.mxu0 0.0
    %290 = vmatpush1.msra.mxu0 0.0
    %291 = vmatprep.subr.mxu0 0.0
    %292 = vmatpush1.msra.mxu0 0.0
    %293 = vmatprep.subr.mxu0 0.0
    %294 = vmatpush1.msra.mxu0 0.0
    %295 = vmatprep.subr.mxu0 0.0
    %296 = vmatpush1.msra.mxu0 0.0
    %297 = vmatprep.subr.mxu0 0.0
    %298 = vmatpush1.msra.mxu0 0.0
    %299 = vmatprep.subr.mxu0 0.0
    %300 = vmatpush1.msra.mxu0 0.0
    %301 = vmatprep.subr.mxu0 0.0
    %302 = vmatpush1.msra.mxu0 0.0
    %303 = vmatprep.subr.mxu0 0.0
    %304 = vmatpush1.msra.mxu0 0.0
    %305 = vmatprep.subr.mxu0 0.0
    %306 = vmatpush1.msra.mxu0 0.0
    %307 = vmatprep.mubr.f32.mxu0 0.0
    %308 = vmatmul.mubr.f32.gmra.mrb[0].mxu0 %v241
    %v309 = vpop.f32.mrb[0].mxu0
    %v310 = vadd.f32 0.0, %v309
    %v311 = vpop.f32.mrb[0].mxu0
    %312 = vdwg.mxu0
    %v314 = vsel %vm217, %v239, 0
    %316 = vmatprep.subr.mxu0 0.0
    %317 = vmatpush1.msra.mxu0 %v63
    %318 = vmatprep.subr.mxu0 0.0
    %319 = vmatpush1.msra.mxu0 0.0
    %320 = vmatprep.subr.mxu0 0.0
    %321 = vmatpush1.msra.mxu0 0.0
    %322 = vmatprep.subr.mxu0 0.0
    %323 = vmatpush1.msra.mxu0 0.0
    %324 = vmatprep.subr.mxu0 0.0
    %325 = vmatpush1.msra.mxu0 0.0
    %326 = vmatprep.subr.mxu0 0.0
    %327 = vmatpush1.msra.mxu0 0.0
    %328 = vmatprep.subr.mxu0 0.0
    %329 = vmatpush1.msra.mxu0 0.0
    %330 = vmatprep.subr.mxu0 0.0
    %331 = vmatpush1.msra.mxu0 0.0
    %332 = vmatprep.subr.mxu0 0.0
    %333 = vmatpush1.msra.mxu0 0.0
    %334 = vmatprep.subr.mxu0 0.0
    %335 = vmatpush1.msra.mxu0 0.0
    %336 = vmatprep.subr.mxu0 0.0
    %337 = vmatpush1.msra.mxu0 0.0
    %338 = vmatprep.subr.mxu0 0.0
    %339 = vmatpush1.msra.mxu0 0.0
    %340 = vmatprep.subr.mxu0 0.0
    %341 = vmatpush1.msra.mxu0 0.0
    %342 = vmatprep.subr.mxu0 0.0
    %343 = vmatpush1.msra.mxu0 0.0
    %344 = vmatprep.subr.mxu0 0.0
    %345 = vmatpush1.msra.mxu0 0.0
    %346 = vmatprep.subr.mxu0 0.0
    %347 = vmatpush1.msra.mxu0 0.0
    %348 = vmatprep.subr.mxu0 0.0
    %349 = vmatpush1.msra.mxu0 0.0
    %350 = vmatprep.subr.mxu0 0.0
    %351 = vmatpush1.msra.mxu0 0.0
    %352 = vmatprep.subr.mxu0 0.0
    %353 = vmatpush1.msra.mxu0 0.0
    %354 = vmatprep.subr.mxu0 0.0
    %355 = vmatpush1.msra.mxu0 0.0
    %356 = vmatprep.subr.mxu0 0.0
    %357 = vmatpush1.msra.mxu0 0.0
    %358 = vmatprep.subr.mxu0 0.0
    %359 = vmatpush1.msra.mxu0 0.0
    %360 = vmatprep.subr.mxu0 0.0
    %361 = vmatpush1.msra.mxu0 0.0
    %362 = vmatprep.subr.mxu0 0.0
    %363 = vmatpush1.msra.mxu0 0.0
    %364 = vmatprep.subr.mxu0 0.0
    %365 = vmatpush1.msra.mxu0 0.0
    %366 = vmatprep.subr.mxu0 0.0
    %367 = vmatpush1.msra.mxu0 0.0
    %368 = vmatprep.subr.mxu0 0.0
    %369 = vmatpush1.msra.mxu0 0.0
    %370 = vmatprep.subr.mxu0 0.0
    %371 = vmatpush1.msra.mxu0 0.0
    %372 = vmatprep.subr.mxu0 0.0
    %373 = vmatpush1.msra.mxu0 0.0
    %374 = vmatprep.subr.mxu0 0.0
    %375 = vmatpush1.msra.mxu0 0.0
    %376 = vmatprep.subr.mxu0 0.0
    %377 = vmatpush1.msra.mxu0 0.0
    %378 = vmatprep.subr.mxu0 0.0
    %379 = vmatpush1.msra.mxu0 0.0
    %380 = vmatprep.mubr.f32.mxu0 0.0
    %381 = vmatmul.mubr.f32.gmra.mrb[0].mxu0 %v314
    %v382 = vpop.f32.mrb[0].mxu0
    %v383 = vadd.f32 0.0, %v382
    %v384 = vpop.f32.mrb[0].mxu0
    %385 = vdwg.mxu0
    %386 = vrot.lane.b32.xlu0 %v58, 112
    %v387 = vpop.permute.xlu0 %386
    %388 = vrot.lane.b32.xlu0 %v60, 112
    %v389 = vpop.permute.xlu0 %388
    %v390 = vsel %vm64, %v387, 0
    %v392 = vsel %vm64, %v389, 0
    %394 = vmatprep.subr.mxu0 0.0
    %395 = vmatpush1.xpose.msra.mxu0 %v392
    %396 = vmatprep.subr.mxu0 0.0
    %397 = vmatpush1.xpose.msra.mxu0 0.0
    %398 = vmatprep.subr.mxu0 0.0
    %399 = vmatpush1.xpose.msra.mxu0 0.0
    %400 = vmatprep.subr.mxu0 0.0
    %401 = vmatpush1.xpose.msra.mxu0 0.0
    %402 = vmatprep.subr.mxu0 0.0
    %403 = vmatpush1.xpose.msra.mxu0 0.0
    %404 = vmatprep.subr.mxu0 0.0
    %405 = vmatpush1.xpose.msra.mxu0 0.0
    %406 = vmatprep.subr.mxu0 0.0
    %407 = vmatpush1.xpose.msra.mxu0 0.0
    %408 = vmatprep.subr.mxu0 0.0
    %409 = vmatpush1.xpose.msra.mxu0 0.0
    %410 = vmatprep.subr.mxu0 0.0
    %411 = vmatpush1.xpose.msra.mxu0 0.0
    %412 = vmatprep.subr.mxu0 0.0
    %413 = vmatpush1.xpose.msra.mxu0 0.0
    %414 = vmatprep.subr.mxu0 0.0
    %415 = vmatpush1.xpose.msra.mxu0 0.0
    %416 = vmatprep.subr.mxu0 0.0
    %417 = vmatpush1.xpose.msra.mxu0 0.0
    %418 = vmatprep.subr.mxu0 0.0
    %419 = vmatpush1.xpose.msra.mxu0 0.0
    %420 = vmatprep.subr.mxu0 0.0
    %421 = vmatpush1.xpose.msra.mxu0 0.0
    %422 = vmatprep.subr.mxu0 0.0
    %423 = vmatpush1.xpose.msra.mxu0 0.0
    %424 = vmatprep.subr.mxu0 0.0
    %425 = vmatpush1.xpose.msra.mxu0 0.0
    %426 = vmatprep.subr.mxu0 0.0
    %427 = vmatpush1.xpose.msra.mxu0 0.0
    %428 = vmatprep.subr.mxu0 0.0
    %429 = vmatpush1.xpose.msra.mxu0 0.0
    %430 = vmatprep.subr.mxu0 0.0
    %431 = vmatpush1.xpose.msra.mxu0 0.0
    %432 = vmatprep.subr.mxu0 0.0
    %433 = vmatpush1.xpose.msra.mxu0 0.0
    %434 = vmatprep.subr.mxu0 0.0
    %435 = vmatpush1.xpose.msra.mxu0 0.0
    %436 = vmatprep.subr.mxu0 0.0
    %437 = vmatpush1.xpose.msra.mxu0 0.0
    %438 = vmatprep.subr.mxu0 0.0
    %439 = vmatpush1.xpose.msra.mxu0 0.0
    %440 = vmatprep.subr.mxu0 0.0
    %441 = vmatpush1.xpose.msra.mxu0 0.0
    %442 = vmatprep.subr.mxu0 0.0
    %443 = vmatpush1.xpose.msra.mxu0 0.0
    %444 = vmatprep.subr.mxu0 0.0
    %445 = vmatpush1.xpose.msra.mxu0 0.0
    %446 = vmatprep.subr.mxu0 0.0
    %447 = vmatpush1.xpose.msra.mxu0 0.0
    %448 = vmatprep.subr.mxu0 0.0
    %449 = vmatpush1.xpose.msra.mxu0 0.0
    %450 = vmatprep.subr.mxu0 0.0
    %451 = vmatpush1.xpose.msra.mxu0 0.0
    %452 = vmatprep.subr.mxu0 0.0
    %453 = vmatpush1.xpose.msra.mxu0 0.0
    %454 = vmatprep.subr.mxu0 0.0
    %455 = vmatpush1.xpose.msra.mxu0 0.0
    %456 = vmatprep.subr.mxu0 0.0
    %457 = vmatpush1.xpose.msra.mxu0 0.0
    %458 = vmatprep.mubr.f32.mxu0 0.0
    %459 = vmatmul.mubr.f32.gmra.mrb[0].mxu0 %v390
    %v460 = vpop.f32.mrb[0].mxu0
    %v461 = vadd.f32 0.0, %v460
    %v462 = vpop.f32.mrb[0].mxu0
    %463 = vdwg.mxu0
    %464 = vrot.lane.b32.xlu0 %v59, 112
    %v465 = vpop.permute.xlu0 %464
    %466 = vrot.lane.b32.xlu0 %v61, 112
    %v467 = vpop.permute.xlu0 %466
    %v468 = vsel %vm64, %v465, 0
    %v470 = vsel %vm64, %v467, 0
    %472 = vmatprep.subr.mxu0 0.0
    %473 = vmatpush1.xpose.msra.mxu0 %v470
    %474 = vmatprep.subr.mxu0 0.0
    %475 = vmatpush1.xpose.msra.mxu0 0.0
    %476 = vmatprep.subr.mxu0 0.0
    %477 = vmatpush1.xpose.msra.mxu0 0.0
    %478 = vmatprep.subr.mxu0 0.0
    %479 = vmatpush1.xpose.msra.mxu0 0.0
    %480 = vmatprep.subr.mxu0 0.0
    %481 = vmatpush1.xpose.msra.mxu0 0.0
    %482 = vmatprep.subr.mxu0 0.0
    %483 = vmatpush1.xpose.msra.mxu0 0.0
    %484 = vmatprep.subr.mxu0 0.0
    %485 = vmatpush1.xpose.msra.mxu0 0.0
    %486 = vmatprep.subr.mxu0 0.0
    %487 = vmatpush1.xpose.msra.mxu0 0.0
    %488 = vmatprep.subr.mxu0 0.0
    %489 = vmatpush1.xpose.msra.mxu0 0.0
    %490 = vmatprep.subr.mxu0 0.0
    %491 = vmatpush1.xpose.msra.mxu0 0.0
    %492 = vmatprep.subr.mxu0 0.0
    %493 = vmatpush1.xpose.msra.mxu0 0.0
    %494 = vmatprep.subr.mxu0 0.0
    %495 = vmatpush1.xpose.msra.mxu0 0.0
    %496 = vmatprep.subr.mxu0 0.0
    %497 = vmatpush1.xpose.msra.mxu0 0.0
    %498 = vmatprep.subr.mxu0 0.0
    %499 = vmatpush1.xpose.msra.mxu0 0.0
    %500 = vmatprep.subr.mxu0 0.0
    %501 = vmatpush1.xpose.msra.mxu0 0.0
    %502 = vmatprep.subr.mxu0 0.0
    %503 = vmatpush1.xpose.msra.mxu0 0.0
    %504 = vmatprep.subr.mxu0 0.0
    %505 = vmatpush1.xpose.msra.mxu0 0.0
    %506 = vmatprep.subr.mxu0 0.0
    %507 = vmatpush1.xpose.msra.mxu0 0.0
    %508 = vmatprep.subr.mxu0 0.0
    %509 = vmatpush1.xpose.msra.mxu0 0.0
    %510 = vmatprep.subr.mxu0 0.0
    %511 = vmatpush1.xpose.msra.mxu0 0.0
    %512 = vmatprep.subr.mxu0 0.0
    %513 = vmatpush1.xpose.msra.mxu0 0.0
    %514 = vmatprep.subr.mxu0 0.0
    %515 = vmatpush1.xpose.msra.mxu0 0.0
    %516 = vmatprep.subr.mxu0 0.0
    %517 = vmatpush1.xpose.msra.mxu0 0.0
    %518 = vmatprep.subr.mxu0 0.0
    %519 = vmatpush1.xpose.msra.mxu0 0.0
    %520 = vmatprep.subr.mxu0 0.0
    %521 = vmatpush1.xpose.msra.mxu0 0.0
    %522 = vmatprep.subr.mxu0 0.0
    %523 = vmatpush1.xpose.msra.mxu0 0.0
    %524 = vmatprep.subr.mxu0 0.0
    %525 = vmatpush1.xpose.msra.mxu0 0.0
    %526 = vmatprep.subr.mxu0 0.0
    %527 = vmatpush1.xpose.msra.mxu0 0.0
    %528 = vmatprep.subr.mxu0 0.0
    %529 = vmatpush1.xpose.msra.mxu0 0.0
    %530 = vmatprep.subr.mxu0 0.0
    %531 = vmatpush1.xpose.msra.mxu0 0.0
    %532 = vmatprep.subr.mxu0 0.0
    %533 = vmatpush1.xpose.msra.mxu0 0.0
    %534 = vmatprep.subr.mxu0 0.0
    %535 = vmatpush1.xpose.msra.mxu0 0.0
    %536 = vmatprep.mubr.f32.mxu0 0.0
    %537 = vmatmul.mubr.f32.gmra.mrb[0].mxu0 %v468
    %v538 = vpop.f32.mrb[0].mxu0
    %v539 = vadd.f32 0.0, %v538
    %v540 = vpop.f32.mrb[0].mxu0
    %541 = vdwg.mxu0
    %v542 = vsel %vm217, %v461, -inf
    %543 = vmax.xlane.f32.xlu0 %v542
    %v544 = vpop.xlane.xlu0 %543
    %v545 = vsel %vm217, %v539, -inf
    %546 = vmax.xlane.f32.xlu0 %v545
    %v547 = vpop.xlane.xlu0 %546
    %v548 = vsub.f32 %v461, %v544
    %v549 = vsub.f32 %v539, %v547
    %v550 = vmul.f32 %v548, 1.442695
    %v551 = vpow.pop %v550
    %v552 = vmul.f32 %v549, 1.442695
    %v553 = vpow.pop %v552
    %v554 = vsel %vm217, %v551, 0.0
    %555 = vadd.xlane.f32.xlu0 %v554
    %v556 = vpop.xlane.xlu0 %555
    %v557 = vsel %vm217, %v553, 0.0
    %558 = vadd.xlane.f32.xlu0 %v557
    %v559 = vpop.xlane.xlu0 %558
    %v560 = vrcp.pop %v556
    %v561 = vrcp.pop %v559
    %v562 = vmul.f32 %v551, %v560
    %v563 = vmul.f32 %v553, %v561
    %565 = vrot.lane.b32.xlu0 %v62, 112
    %v566 = vpop.permute.xlu0 %565
    %v569 = vsel %vm217, %v562, 0
    %571 = vmatprep.subr.mxu0 0.0
    %572 = vmatpush1.msra.mxu0 %v566
    %573 = vmatprep.subr.mxu0 0.0
    %574 = vmatpush1.msra.mxu0 0.0
    %575 = vmatprep.subr.mxu0 0.0
    %576 = vmatpush1.msra.mxu0 0.0
    %577 = vmatprep.subr.mxu0 0.0
    %578 = vmatpush1.msra.mxu0 0.0
    %579 = vmatprep.subr.mxu0 0.0
    %580 = vmatpush1.msra.mxu0 0.0
    %581 = vmatprep.subr.mxu0 0.0
    %582 = vmatpush1.msra.mxu0 0.0
    %583 = vmatprep.subr.mxu0 0.0
    %584 = vmatpush1.msra.mxu0 0.0
    %585 = vmatprep.subr.mxu0 0.0
    %586 = vmatpush1.msra.mxu0 0.0
    %587 = vmatprep.subr.mxu0 0.0
    %588 = vmatpush1.msra.mxu0 0.0
    %589 = vmatprep.subr.mxu0 0.0
    %590 = vmatpush1.msra.mxu0 0.0
    %591 = vmatprep.subr.mxu0 0.0
    %592 = vmatpush1.msra.mxu0 0.0
    %593 = vmatprep.subr.mxu0 0.0
    %594 = vmatpush1.msra.mxu0 0.0
    %595 = vmatprep.subr.mxu0 0.0
    %596 = vmatpush1.msra.mxu0 0.0
    %597 = vmatprep.subr.mxu0 0.0
    %598 = vmatpush1.msra.mxu0 0.0
    %599 = vmatprep.subr.mxu0 0.0
    %600 = vmatpush1.msra.mxu0 0.0
    %601 = vmatprep.subr.mxu0 0.0
    %602 = vmatpush1.msra.mxu0 0.0
    %603 = vmatprep.subr.mxu0 0.0
    %604 = vmatpush1.msra.mxu0 0.0
    %605 = vmatprep.subr.mxu0 0.0
    %606 = vmatpush1.msra.mxu0 0.0
    %607 = vmatprep.subr.mxu0 0.0
    %608 = vmatpush1.msra.mxu0 0.0
    %609 = vmatprep.subr.mxu0 0.0
    %610 = vmatpush1.msra.mxu0 0.0
    %611 = vmatprep.subr.mxu0 0.0
    %612 = vmatpush1.msra.mxu0 0.0
    %613 = vmatprep.subr.mxu0 0.0
    %614 = vmatpush1.msra.mxu0 0.0
    %615 = vmatprep.subr.mxu0 0.0
    %616 = vmatpush1.msra.mxu0 0.0
    %617 = vmatprep.subr.mxu0 0.0
    %618 = vmatpush1.msra.mxu0 0.0
    %619 = vmatprep.subr.mxu0 0.0
    %620 = vmatpush1.msra.mxu0 0.0
    %621 = vmatprep.subr.mxu0 0.0
    %622 = vmatpush1.msra.mxu0 0.0
    %623 = vmatprep.subr.mxu0 0.0
    %624 = vmatpush1.msra.mxu0 0.0
    %625 = vmatprep.subr.mxu0 0.0
    %626 = vmatpush1.msra.mxu0 0.0
    %627 = vmatprep.subr.mxu0 0.0
    %628 = vmatpush1.msra.mxu0 0.0
    %629 = vmatprep.subr.mxu0 0.0
    %630 = vmatpush1.msra.mxu0 0.0
    %631 = vmatprep.subr.mxu0 0.0
    %632 = vmatpush1.msra.mxu0 0.0
    %633 = vmatprep.subr.mxu0 0.0
    %634 = vmatpush1.msra.mxu0 0.0
    %635 = vmatprep.mubr.f32.mxu0 0.0
    %636 = vmatmul.mubr.f32.gmra.mrb[0].mxu0 %v569
    %v637 = vpop.f32.mrb[0].mxu0
    %v638 = vadd.f32 0.0, %v637
    %v639 = vpop.f32.mrb[0].mxu0
    %640 = vdwg.mxu0
    %642 = vrot.lane.b32.xlu0 %v63, 112
    %v643 = vpop.permute.xlu0 %642
    %v646 = vsel %vm217, %v563, 0
    %648 = vmatprep.subr.mxu0 0.0
    %649 = vmatpush1.msra.mxu0 %v643
    %650 = vmatprep.subr.mxu0 0.0
    %651 = vmatpush1.msra.mxu0 0.0
    %652 = vmatprep.subr.mxu0 0.0
    %653 = vmatpush1.msra.mxu0 0.0
    %654 = vmatprep.subr.mxu0 0.0
    %655 = vmatpush1.msra.mxu0 0.0
    %656 = vmatprep.subr.mxu0 0.0
    %657 = vmatpush1.msra.mxu0 0.0
    %658 = vmatprep.subr.mxu0 0.0
    %659 = vmatpush1.msra.mxu0 0.0
    %660 = vmatprep.subr.mxu0 0.0
    %661 = vmatpush1.msra.mxu0 0.0
    %662 = vmatprep.subr.mxu0 0.0
    %663 = vmatpush1.msra.mxu0 0.0
    %664 = vmatprep.subr.mxu0 0.0
    %665 = vmatpush1.msra.mxu0 0.0
    %666 = vmatprep.subr.mxu0 0.0
    %667 = vmatpush1.msra.mxu0 0.0
    %668 = vmatprep.subr.mxu0 0.0
    %669 = vmatpush1.msra.mxu0 0.0
    %670 = vmatprep.subr.mxu0 0.0
    %671 = vmatpush1.msra.mxu0 0.0
    %672 = vmatprep.subr.mxu0 0.0
    %673 = vmatpush1.msra.mxu0 0.0
    %674 = vmatprep.subr.mxu0 0.0
    %675 = vmatpush1.msra.mxu0 0.0
    %676 = vmatprep.subr.mxu0 0.0
    %677 = vmatpush1.msra.mxu0 0.0
    %678 = vmatprep.subr.mxu0 0.0
    %679 = vmatpush1.msra.mxu0 0.0
    %680 = vmatprep.subr.mxu0 0.0
    %681 = vmatpush1.msra.mxu0 0.0
    %682 = vmatprep.subr.mxu0 0.0
    %683 = vmatpush1.msra.mxu0 0.0
    %684 = vmatprep.subr.mxu0 0.0
    %685 = vmatpush1.msra.mxu0 0.0
    %686 = vmatprep.subr.mxu0 0.0
    %687 = vmatpush1.msra.mxu0 0.0
    %688 = vmatprep.subr.mxu0 0.0
    %689 = vmatpush1.msra.mxu0 0.0
    %690 = vmatprep.subr.mxu0 0.0
    %691 = vmatpush1.msra.mxu0 0.0
    %692 = vmatprep.subr.mxu0 0.0
    %693 = vmatpush1.msra.mxu0 0.0
    %694 = vmatprep.subr.mxu0 0.0
    %695 = vmatpush1.msra.mxu0 0.0
    %696 = vmatprep.subr.mxu0 0.0
    %697 = vmatpush1.msra.mxu0 0.0
    %698 = vmatprep.subr.mxu0 0.0
    %699 = vmatpush1.msra.mxu0 0.0
    %700 = vmatprep.subr.mxu0 0.0
    %701 = vmatpush1.msra.mxu0 0.0
    %702 = vmatprep.subr.mxu0 0.0
    %703 = vmatpush1.msra.mxu0 0.0
    %704 = vmatprep.subr.mxu0 0.0
    %705 = vmatpush1.msra.mxu0 0.0
    %706 = vmatprep.subr.mxu0 0.0
    %707 = vmatpush1.msra.mxu0 0.0
    %708 = vmatprep.subr.mxu0 0.0
    %709 = vmatpush1.msra.mxu0 0.0
    %710 = vmatprep.subr.mxu0 0.0
    %711 = vmatpush1.msra.mxu0 0.0
    %712 = vmatprep.mubr.f32.mxu0 0.0
    %713 = vmatmul.mubr.f32.gmra.mrb[0].mxu0 %v646
    %v714 = vpop.f32.mrb[0].mxu0
    %v715 = vadd.f32 0.0, %v714
    %v716 = vpop.f32.mrb[0].mxu0
    %717 = vdwg.mxu0
    %718 = vrot.lane.b32.xlu0 %v58, 96
    %v719 = vpop.permute.xlu0 %718
    %720 = vrot.lane.b32.xlu0 %v60, 96
    %v721 = vpop.permute.xlu0 %720
    %v722 = vsel %vm64, %v719, 0
    %v724 = vsel %vm64, %v721, 0
    %726 = vmatprep.subr.mxu0 0.0
    %727 = vmatpush1.xpose.msra.mxu0 %v724
    %728 = vmatprep.subr.mxu0 0.0
    %729 = vmatpush1.xpose.msra.mxu0 0.0
    %730 = vmatprep.subr.mxu0 0.0
    %731 = vmatpush1.xpose.msra.mxu0 0.0
    %732 = vmatprep.subr.mxu0 0.0
    %733 = vmatpush1.xpose.msra.mxu0 0.0
    %734 = vmatprep.subr.mxu0 0.0
    %735 = vmatpush1.xpose.msra.mxu0 0.0
    %736 = vmatprep.subr.mxu0 0.0
    %737 = vmatpush1.xpose.msra.mxu0 0.0
    %738 = vmatprep.subr.mxu0 0.0
    %739 = vmatpush1.xpose.msra.mxu0 0.0
    %740 = vmatprep.subr.mxu0 0.0
    %741 = vmatpush1.xpose.msra.mxu0 0.0
    %742 = vmatprep.subr.mxu0 0.0
    %743 = vmatpush1.xpose.msra.mxu0 0.0
    %744 = vmatprep.subr.mxu0 0.0
    %745 = vmatpush1.xpose.msra.mxu0 0.0
    %746 = vmatprep.subr.mxu0 0.0
    %747 = vmatpush1.xpose.msra.mxu0 0.0
    %748 = vmatprep.subr.mxu0 0.0
    %749 = vmatpush1.xpose.msra.mxu0 0.0
    %750 = vmatprep.subr.mxu0 0.0
    %751 = vmatpush1.xpose.msra.mxu0 0.0
    %752 = vmatprep.subr.mxu0 0.0
    %753 = vmatpush1.xpose.msra.mxu0 0.0
    %754 = vmatprep.subr.mxu0 0.0
    %755 = vmatpush1.xpose.msra.mxu0 0.0
    %756 = vmatprep.subr.mxu0 0.0
    %757 = vmatpush1.xpose.msra.mxu0 0.0
    %758 = vmatprep.subr.mxu0 0.0
    %759 = vmatpush1.xpose.msra.mxu0 0.0
    %760 = vmatprep.subr.mxu0 0.0
    %761 = vmatpush1.xpose.msra.mxu0 0.0
    %762 = vmatprep.subr.mxu0 0.0
    %763 = vmatpush1.xpose.msra.mxu0 0.0
    %764 = vmatprep.subr.mxu0 0.0
    %765 = vmatpush1.xpose.msra.mxu0 0.0
    %766 = vmatprep.subr.mxu0 0.0
    %767 = vmatpush1.xpose.msra.mxu0 0.0
    %768 = vmatprep.subr.mxu0 0.0
    %769 = vmatpush1.xpose.msra.mxu0 0.0
    %770 = vmatprep.subr.mxu0 0.0
    %771 = vmatpush1.xpose.msra.mxu0 0.0
    %772 = vmatprep.subr.mxu0 0.0
    %773 = vmatpush1.xpose.msra.mxu0 0.0
    %774 = vmatprep.subr.mxu0 0.0
    %775 = vmatpush1.xpose.msra.mxu0 0.0
    %776 = vmatprep.subr.mxu0 0.0
    %777 = vmatpush1.xpose.msra.mxu0 0.0
    %778 = vmatprep.subr.mxu0 0.0
    %779 = vmatpush1.xpose.msra.mxu0 0.0
    %780 = vmatprep.subr.mxu0 0.0
    %781 = vmatpush1.xpose.msra.mxu0 0.0
    %782 = vmatprep.subr.mxu0 0.0
    %783 = vmatpush1.xpose.msra.mxu0 0.0
    %784 = vmatprep.subr.mxu0 0.0
    %785 = vmatpush1.xpose.msra.mxu0 0.0
    %786 = vmatprep.subr.mxu0 0.0
    %787 = vmatpush1.xpose.msra.mxu0 0.0
    %788 = vmatprep.subr.mxu0 0.0
    %789 = vmatpush1.xpose.msra.mxu0 0.0
    %790 = vmatprep.mubr.f32.mxu0 0.0
    %791 = vmatmul.mubr.f32.gmra.mrb[0].mxu0 %v722
    %v792 = vpop.f32.mrb[0].mxu0
    %v793 = vadd.f32 0.0, %v792
    %v794 = vpop.f32.mrb[0].mxu0
    %795 = vdwg.mxu0
    %796 = vrot.lane.b32.xlu0 %v59, 96
    %v797 = vpop.permute.xlu0 %796
    %798 = vrot.lane.b32.xlu0 %v61, 96
    %v799 = vpop.permute.xlu0 %798
    %v800 = vsel %vm64, %v797, 0
    %v802 = vsel %vm64, %v799, 0
    %804 = vmatprep.subr.mxu0 0.0
    %805 = vmatpush1.xpose.msra.mxu0 %v802
    %806 = vmatprep.subr.mxu0 0.0
    %807 = vmatpush1.xpose.msra.mxu0 0.0
    %808 = vmatprep.subr.mxu0 0.0
    %809 = vmatpush1.xpose.msra.mxu0 0.0
    %810 = vmatprep.subr.mxu0 0.0
    %811 = vmatpush1.xpose.msra.mxu0 0.0
    %812 = vmatprep.subr.mxu0 0.0
    %813 = vmatpush1.xpose.msra.mxu0 0.0
    %814 = vmatprep.subr.mxu0 0.0
    %815 = vmatpush1.xpose.msra.mxu0 0.0
    %816 = vmatprep.subr.mxu0 0.0
    %817 = vmatpush1.xpose.msra.mxu0 0.0
    %818 = vmatprep.subr.mxu0 0.0
    %819 = vmatpush1.xpose.msra.mxu0 0.0
    %820 = vmatprep.subr.mxu0 0.0
    %821 = vmatpush1.xpose.msra.mxu0 0.0
    %822 = vmatprep.subr.mxu0 0.0
    %823 = vmatpush1.xpose.msra.mxu0 0.0
    %824 = vmatprep.subr.mxu0 0.0
    %825 = vmatpush1.xpose.msra.mxu0 0.0
    %826 = vmatprep.subr.mxu0 0.0
    %827 = vmatpush1.xpose.msra.mxu0 0.0
    %828 = vmatprep.subr.mxu0 0.0
    %829 = vmatpush1.xpose.msra.mxu0 0.0
    %830 = vmatprep.subr.mxu0 0.0
    %831 = vmatpush1.xpose.msra.mxu0 0.0
    %832 = vmatprep.subr.mxu0 0.0
    %833 = vmatpush1.xpose.msra.mxu0 0.0
    %834 = vmatprep.subr.mxu0 0.0
    %835 = vmatpush1.xpose.msra.mxu0 0.0
    %836 = vmatprep.subr.mxu0 0.0
    %837 = vmatpush1.xpose.msra.mxu0 0.0
    %838 = vmatprep.subr.mxu0 0.0
    %839 = vmatpush1.xpose.msra.mxu0 0.0
    %840 = vmatprep.subr.mxu0 0.0
    %841 = vmatpush1.xpose.msra.mxu0 0.0
    %842 = vmatprep.subr.mxu0 0.0
    %843 = vmatpush1.xpose.msra.mxu0 0.0
    %844 = vmatprep.subr.mxu0 0.0
    %845 = vmatpush1.xpose.msra.mxu0 0.0
    %846 = vmatprep.subr.mxu0 0.0
    %847 = vmatpush1.xpose.msra.mxu0 0.0
    %848 = vmatprep.subr.mxu0 0.0
    %849 = vmatpush1.xpose.msra.mxu0 0.0
    %850 = vmatprep.subr.mxu0 0.0
    %851 = vmatpush1.xpose.msra.mxu0 0.0
    %852 = vmatprep.subr.mxu0 0.0
    %853 = vmatpush1.xpose.msra.mxu0 0.0
    %854 = vmatprep.subr.mxu0 0.0
    %855 = vmatpush1.xpose.msra.mxu0 0.0
    %856 = vmatprep.subr.mxu0 0.0
    %857 = vmatpush1.xpose.msra.mxu0 0.0
    %858 = vmatprep.subr.mxu0 0.0
    %859 = vmatpush1.xpose.msra.mxu0 0.0
    %860 = vmatprep.subr.mxu0 0.0
    %861 = vmatpush1.xpose.msra.mxu0 0.0
    %862 = vmatprep.subr.mxu0 0.0
    %863 = vmatpush1.xpose.msra.mxu0 0.0
    %864 = vmatprep.subr.mxu0 0.0
    %865 = vmatpush1.xpose.msra.mxu0 0.0
    %866 = vmatprep.subr.mxu0 0.0
    %867 = vmatpush1.xpose.msra.mxu0 0.0
    %868 = vmatprep.mubr.f32.mxu0 0.0
    %869 = vmatmul.mubr.f32.gmra.mrb[0].mxu0 %v800
    %v870 = vpop.f32.mrb[0].mxu0
    %v871 = vadd.f32 0.0, %v870
    %v872 = vpop.f32.mrb[0].mxu0
    %873 = vdwg.mxu0
    %v874 = vsel %vm217, %v793, -inf
    %875 = vmax.xlane.f32.xlu0 %v874
    %v876 = vpop.xlane.xlu0 %875
    %v877 = vsel %vm217, %v871, -inf
    %878 = vmax.xlane.f32.xlu0 %v877
    %v879 = vpop.xlane.xlu0 %878
    %v880 = vsub.f32 %v793, %v876
    %v881 = vsub.f32 %v871, %v879
    %v882 = vmul.f32 %v880, 1.442695
    %v883 = vpow.pop %v882
    %v884 = vmul.f32 %v881, 1.442695
    %v885 = vpow.pop %v884
    %v886 = vsel %vm217, %v883, 0.0
    %887 = vadd.xlane.f32.xlu0 %v886
    %v888 = vpop.xlane.xlu0 %887
    %v889 = vsel %vm217, %v885, 0.0
    %890 = vadd.xlane.f32.xlu0 %v889
    %v891 = vpop.xlane.xlu0 %890
    %v892 = vrcp.pop %v888
    %v893 = vrcp.pop %v891
    %v894 = vmul.f32 %v883, %v892
    %v895 = vmul.f32 %v885, %v893
    %896 = vrot.lane.b32.xlu0 %v62, 96
    %v897 = vpop.permute.xlu0 %896
    %v900 = vsel %vm217, %v894, 0
    %902 = vmatprep.subr.mxu0 0.0
    %903 = vmatpush1.msra.mxu0 %v897
    %904 = vmatprep.subr.mxu0 0.0
    %905 = vmatpush1.msra.mxu0 0.0
    %906 = vmatprep.subr.mxu0 0.0
    %907 = vmatpush1.msra.mxu0 0.0
    %908 = vmatprep.subr.mxu0 0.0
    %909 = vmatpush1.msra.mxu0 0.0
    %910 = vmatprep.subr.mxu0 0.0
    %911 = vmatpush1.msra.mxu0 0.0
    %912 = vmatprep.subr.mxu0 0.0
    %913 = vmatpush1.msra.mxu0 0.0
    %914 = vmatprep.subr.mxu0 0.0
    %915 = vmatpush1.msra.mxu0 0.0
    %916 = vmatprep.subr.mxu0 0.0
    %917 = vmatpush1.msra.mxu0 0.0
    %918 = vmatprep.subr.mxu0 0.0
    %919 = vmatpush1.msra.mxu0 0.0
    %920 = vmatprep.subr.mxu0 0.0
    %921 = vmatpush1.msra.mxu0 0.0
    %922 = vmatprep.subr.mxu0 0.0
    %923 = vmatpush1.msra.mxu0 0.0
    %924 = vmatprep.subr.mxu0 0.0
    %925 = vmatpush1.msra.mxu0 0.0
    %926 = vmatprep.subr.mxu0 0.0
    %927 = vmatpush1.msra.mxu0 0.0
    %928 = vmatprep.subr.mxu0 0.0
    %929 = vmatpush1.msra.mxu0 0.0
    %930 = vmatprep.subr.mxu0 0.0
    %931 = vmatpush1.msra.mxu0 0.0
    %932 = vmatprep.subr.mxu0 0.0
    %933 = vmatpush1.msra.mxu0 0.0
    %934 = vmatprep.subr.mxu0 0.0
    %935 = vmatpush1.msra.mxu0 0.0
    %936 = vmatprep.subr.mxu0 0.0
    %937 = vmatpush1.msra.mxu0 0.0
    %938 = vmatprep.subr.mxu0 0.0
    %939 = vmatpush1.msra.mxu0 0.0
    %940 = vmatprep.subr.mxu0 0.0
    %941 = vmatpush1.msra.mxu0 0.0
    %942 = vmatprep.subr.mxu0 0.0
    %943 = vmatpush1.msra.mxu0 0.0
    %944 = vmatprep.subr.mxu0 0.0
    %945 = vmatpush1.msra.mxu0 0.0
    %946 = vmatprep.subr.mxu0 0.0
    %947 = vmatpush1.msra.mxu0 0.0
    %948 = vmatprep.subr.mxu0 0.0
    %949 = vmatpush1.msra.mxu0 0.0
    %950 = vmatprep.subr.mxu0 0.0
    %951 = vmatpush1.msra.mxu0 0.0
    %952 = vmatprep.subr.mxu0 0.0
    %953 = vmatpush1.msra.mxu0 0.0
    %954 = vmatprep.subr.mxu0 0.0
    %955 = vmatpush1.msra.mxu0 0.0
    %956 = vmatprep.subr.mxu0 0.0
    %957 = vmatpush1.msra.mxu0 0.0
    %958 = vmatprep.subr.mxu0 0.0
    %959 = vmatpush1.msra.mxu0 0.0
    %960 = vmatprep.subr.mxu0 0.0
    %961 = vmatpush1.msra.mxu0 0.0
    %962 = vmatprep.subr.mxu0 0.0
    %963 = vmatpush1.msra.mxu0 0.0
    %964 = vmatprep.subr.mxu0 0.0
    %965 = vmatpush1.msra.mxu0 0.0
    %966 = vmatprep.mubr.f32.mxu0 0.0
    %967 = vmatmul.mubr.f32.gmra.mrb[0].mxu0 %v900
    %v968 = vpop.f32.mrb[0].mxu0
    %v969 = vadd.f32 0.0, %v968
    %v970 = vpop.f32.mrb[0].mxu0
    %971 = vdwg.mxu0
    %972 = vrot.lane.b32.xlu0 %v63, 96
    %v973 = vpop.permute.xlu0 %972
    %v976 = vsel %vm217, %v895, 0
    %978 = vmatprep.subr.mxu0 0.0
    %979 = vmatpush1.msra.mxu0 %v973
    %980 = vmatprep.subr.mxu0 0.0
    %981 = vmatpush1.msra.mxu0 0.0
    %982 = vmatprep.subr.mxu0 0.0
    %983 = vmatpush1.msra.mxu0 0.0
    %984 = vmatprep.subr.mxu0 0.0
    %985 = vmatpush1.msra.mxu0 0.0
    %986 = vmatprep.subr.mxu0 0.0
    %987 = vmatpush1.msra.mxu0 0.0
    %988 = vmatprep.subr.mxu0 0.0
    %989 = vmatpush1.msra.mxu0 0.0
    %990 = vmatprep.subr.mxu0 0.0
    %991 = vmatpush1.msra.mxu0 0.0
    %992 = vmatprep.subr.mxu0 0.0
    %993 = vmatpush1.msra.mxu0 0.0
    %994 = vmatprep.subr.mxu0 0.0
    %995 = vmatpush1.msra.mxu0 0.0
    %996 = vmatprep.subr.mxu0 0.0
    %997 = vmatpush1.msra.mxu0 0.0
    %998 = vmatprep.subr.mxu0 0.0
    %999 = vmatpush1.msra.mxu0 0.0
    %1000 = vmatprep.subr.mxu0 0.0
    %1001 = vmatpush1.msra.mxu0 0.0
    %1002 = vmatprep.subr.mxu0 0.0
    %1003 = vmatpush1.msra.mxu0 0.0
    %1004 = vmatprep.subr.mxu0 0.0
    %1005 = vmatpush1.msra.mxu0 0.0
    %1006 = vmatprep.subr.mxu0 0.0
    %1007 = vmatpush1.msra.mxu0 0.0
    %1008 = vmatprep.subr.mxu0 0.0
    %1009 = vmatpush1.msra.mxu0 0.0
    %1010 = vmatprep.subr.mxu0 0.0
    %1011 = vmatpush1.msra.mxu0 0.0
    %1012 = vmatprep.subr.mxu0 0.0
    %1013 = vmatpush1.msra.mxu0 0.0
    %1014 = vmatprep.subr.mxu0 0.0
    %1015 = vmatpush1.msra.mxu0 0.0
    %1016 = vmatprep.subr.mxu0 0.0
    %1017 = vmatpush1.msra.mxu0 0.0
    %1018 = vmatprep.subr.mxu0 0.0
    %1019 = vmatpush1.msra.mxu0 0.0
    %1020 = vmatprep.subr.mxu0 0.0
    %1021 = vmatpush1.msra.mxu0 0.0
    %1022 = vmatprep.subr.mxu0 0.0
    %1023 = vmatpush1.msra.mxu0 0.0
    %1024 = vmatprep.subr.mxu0 0.0
    %1025 = vmatpush1.msra.mxu0 0.0
    %1026 = vmatprep.subr.mxu0 0.0
    %1027 = vmatpush1.msra.mxu0 0.0
    %1028 = vmatprep.subr.mxu0 0.0
    %1029 = vmatpush1.msra.mxu0 0.0
    %1030 = vmatprep.subr.mxu0 0.0
    %1031 = vmatpush1.msra.mxu0 0.0
    %1032 = vmatprep.subr.mxu0 0.0
    %1033 = vmatpush1.msra.mxu0 0.0
    %1034 = vmatprep.subr.mxu0 0.0
    %1035 = vmatpush1.msra.mxu0 0.0
    %1036 = vmatprep.subr.mxu0 0.0
    %1037 = vmatpush1.msra.mxu0 0.0
    %1038 = vmatprep.subr.mxu0 0.0
    %1039 = vmatpush1.msra.mxu0 0.0
    %1040 = vmatprep.subr.mxu0 0.0
    %1041 = vmatpush1.msra.mxu0 0.0
    %1042 = vmatprep.mubr.f32.mxu0 0.0
    %1043 = vmatmul.mubr.f32.gmra.mrb[0].mxu0 %v976
    %v1044 = vpop.f32.mrb[0].mxu0
    %v1045 = vadd.f32 0.0, %v1044
    %v1046 = vpop.f32.mrb[0].mxu0
    %1047 = vdwg.mxu0
    %1050 = vrot.lane.b32.xlu0 %v638, 16
    %v1051 = vpop.permute.xlu0 %1050
    %1052 = vrot.lane.b32.xlu0 %v715, 16
    %v1053 = vpop.permute.xlu0 %1052
    %1058 = vrot.lane.b32.xlu0 %v969, 32
    %v1059 = vpop.permute.xlu0 %1058
    %1060 = vrot.lane.b32.xlu0 %v1045, 32
    %v1061 = vpop.permute.xlu0 %1060
    %v1064 = vsel %vm64, %v310, %v1051
    %v1065 = vsel %vm64, %v383, %v1053
    %vm1066 = vcmask 261120
    %v1067 = vsel %vm1066, %v1064, %v1059
    %v1068 = vsel %vm1066, %v1065, %v1061
    %vm1069 = vcmask 392192
    %1070 = vst.msk [vmem:[#allocation8] sm:$0xff] %vm1069, %v1067
    %1071 = vst.msk [vmem:[#allocation8 + $0x8] sm:$0xff] %vm1069, %v1068
    // Predicated region
    $region26: #{tpu_custom_call.1} parent=1 // pred_check
      _
    $region27: #{tpu_custom_call.1} parent=1 // pred_check_branch
      %1073 = sbr.rel (0) target = $region29
    $region28: #{tpu_custom_call.1} parent=1 // pred_region
      %s1075 = ssub.s32 256, 256
      %1076 = vsyncadd [#allocation4], %s1075
      %s1077 = sshll.u32 [#allocation8], 4
      %s1078 = int_to_ptr.vmem [resolvable:$true] %s1077
      %1083 = dma.vmem_to_hbm [thread:$0]  %s1078, 256, %s3, [#allocation4], 128, 128, 8
    $region29: #{tpu_custom_call.1} parent=1 // pred_fallthru
      _
    // Predicated region
    $region30: #{tpu_custom_call.1} parent=1 // pred_check
      _
    $region31: #{tpu_custom_call.1} parent=1 // pred_check_branch
      %1085 = sbr.rel (0) target = $region33
    $region32: #{tpu_custom_call.1} parent=1 // pred_region
      %1086 = dma.done [#allocation4], 256
    $region33: #{tpu_custom_call.1} parent=1 // pred_fallthru
      _
    %1087 = vsyncpa [#allocation3], 1
    %1088 = vsyncpa [#allocation6], 1
    %1089 = vsyncpa [#allocation4], 1

</llo_original>
